<compile_context>
chip_gen: v7x
topology: tpu7x:2x2x1
jax: 0.10.0
libtpu: 0.0.40
codegen_flags: <defaults>
</compile_context>

<pallas_src>
import math
from functools import partial

import jax
import jax.numpy as jnp
from jax.experimental import pallas as pl
from jax.experimental.pallas import tpu as pltpu


def _cdiv(a, b):
    return -(-a // b)


def _round_up(x, m):
    return _cdiv(x, m) * m


def _vmem_capacity_bytes():
    try:
        return int(pltpu.get_tpu_info().vmem_capacity_bytes)
    except Exception:
        return 64 * 1024 * 1024  # conservative fallback: v7x per-TensorCore VMEM


def _gcn_kernel(*refs, n_valid, tk, has_bias, single_k, mask_k_edge):
    """One (row-tile, K-tile) step: adj_tile @ support_slice with f32 accumulation.

    refs = (adj_ref, sup_ref[, bias_ref], o_ref[, acc_ref])
    """
    idx = 0
    adj_ref = refs[idx]; idx += 1
    sup_ref = refs[idx]; idx += 1
    b_ref = None
    if has_bias:
        b_ref = refs[idx]; idx += 1
    o_ref = refs[idx]; idx += 1
    acc_ref = None if single_k else refs[idx]

    k = pl.program_id(1)

    a = adj_ref[...]
    if mask_k_edge:
        # The last K tile may read past adj's column extent (adj is streamed
        # unpadded); zero those columns so they cannot contaminate the sum.
        valid = jnp.minimum(n_valid - k * tk, tk)
        col = jax.lax.broadcasted_iota(jnp.int32, a.shape, 1)
        a = jnp.where(col < valid, a, jnp.zeros_like(a))
    a = a.astype(jnp.bfloat16)  # cast in-kernel; adj streamed in native dtype

    if single_k:
        s_blk = sup_ref[...]
    else:
        ks = pl.multiple_of(k * tk, 128)
        s_blk = sup_ref[pl.ds(ks, tk), :]

    contrib = jnp.dot(a, s_blk, preferred_element_type=jnp.float32)

    if single_k:
        res = (contrib + b_ref[...]) if has_bias else contrib
        o_ref[...] = res.astype(o_ref.dtype)
    else:
        @pl.when(k == 0)
        def _():
            acc_ref[...] = jnp.zeros_like(acc_ref)

        acc_ref[...] += contrib

        @pl.when(k == pl.num_programs(1) - 1)
        def _():
            res = (acc_ref[...] + b_ref[...]) if has_bias else acc_ref[...]
            o_ref[...] = res.astype(o_ref.dtype)


def graph_convolution(x, adj, weight, bias=None, *, tm=1024, tk=2048):
    """GCN layer: adj @ (x @ weight) [+ bias], adj streamed through Pallas.

    x: [N, F_in], adj: [N, N], weight: [F_in, F_out], bias: [F_out] or None.
    """
    N = x.shape[0]
    f_out = weight.shape[1]
    out_dtype = x.dtype
    has_bias = bias is not None

    # --- tiny dense X @ W hoisted out of the streaming kernel (plain XLA, f32) --
    support = jnp.dot(x.astype(jnp.float32), weight.astype(jnp.float32),
                      preferred_element_type=jnp.float32)          # [N, f_out]

    f_pad = _round_up(f_out, 128)   # lane-dense output width; keep at 128 (HBM-bound)

    # --- tile selection ---------------------------------------------------------
    # Rows: multiple of 16 (bf16 sublane packing); K: multiple of 128 lanes.
    # Tiles are kept no larger than the aligned-down extent so every block starts
    # inside adj; graphs smaller than one minimum tile fall back to a tiny pad.
    tm = _round_up(max(16, min(tm, max(16, (N // 16) * 16))), 16)
    tk = _round_up(max(128, min(tk, max(128, (N // 128) * 128))), 128)

    nr_pad = N if N >= 16 else 16
    nc_pad = N if N >= 128 else 128

    out_itemsize = jnp.dtype(out_dtype).itemsize

    def _vmem_need(tm_, tk_):
        n_k_pad_ = _round_up(nc_pad, tk_)
        return (2 * tm_ * tk_ * adj.dtype.itemsize     # adj tiles, double-buffered
                + n_k_pad_ * f_pad * 2                 # resident bf16 support
                + tm_ * f_pad * 4                      # f32 accumulator
                + 2 * tm_ * f_pad * out_itemsize       # output, double-buffered
                + (2 * f_pad * 4 if has_bias else 0))  # bias

    # ~48 MiB on v7x (64 MiB VMEM), ~96 MiB on v5e/v6e (128 MiB) -- shrink tiles
    # until the footprint fits with headroom.
    vmem_budget = int(0.75 * _vmem_capacity_bytes())
    while _vmem_need(tm, tk) > vmem_budget and (tm > 256 or tk > 512):
        if tk >= 2 * tm:
            tk = max(512, tk // 2)
        else:
            tm = max(256, tm // 2)

    n_mb = _cdiv(nr_pad, tm)
    n_kb = _cdiv(nc_pad, tk)
    n_k_pad = n_kb * tk
    single_k = n_kb == 1
    mask_k_edge = (nc_pad == N) and (N % tk != 0)

    # adj streamed from HBM with NO materialized copy; only graphs smaller than
    # the minimum tile alignment get padded (< 64 KiB).
    # TODO(synk): if adj is static/reused across GCN layers, cast it to bf16 once
    # outside and pass that in to halve the streamed adj bytes further.
    adj_in = adj
    if (nr_pad, nc_pad) != (N, N):
        adj_in = jnp.zeros((nr_pad, nc_pad), adj.dtype).at[:N, :N].set(adj)

    # support is tiny (N x f_pad): pad rows to the K grid, cast to bf16 once, and
    # keep it fully VMEM-resident (constant index_map -> fetched once).
    sup_p = jnp.zeros((n_k_pad, f_pad), jnp.bfloat16).at[:N, :f_out].set(
        support.astype(jnp.bfloat16))

    in_specs = [
        pl.BlockSpec((tm, tk), lambda i, k: (i, k)),          # adj, streamed
        pl.BlockSpec((n_k_pad, f_pad), lambda i, k: (0, 0)),  # support, resident
    ]
    operands = [adj_in, sup_p]
    if has_bias:
        bias_p = jnp.zeros((1, f_pad), jnp.float32).at[0, :f_out].set(
            bias.astype(jnp.float32))
        in_specs.append(pl.BlockSpec((1, f_pad), lambda i, k: (0, 0)))
        operands.append(bias_p)

    scratch = [] if single_k else [pltpu.VMEM((tm, f_pad), jnp.float32)]

    cost = pl.CostEstimate(
        flops=2 * n_mb * tm * n_k_pad * f_pad,
        bytes_accessed=(adj_in.size * adj_in.dtype.itemsize     # adj read once
                        + sup_p.size * 2                        # support once
                        + (f_pad * 4 if has_bias else 0)
                        + nr_pad * f_pad * out_itemsize),
        transcendentals=0,
    )

    vmem_limit = min(vmem_budget,
                     max(int(_vmem_need(tm, tk) * 1.3) + (2 << 20), 32 << 20))

    kernel = partial(_gcn_kernel, n_valid=N, tk=tk, has_bias=has_bias,
                     single_k=single_k, mask_k_edge=mask_k_edge)

    out = pl.pallas_call(
        kernel,
        out_shape=jax.ShapeDtypeStruct((nr_pad, f_pad), out_dtype),
        grid_spec=pltpu.PrefetchScalarGridSpec(
            num_scalar_prefetch=0,
            grid=(n_mb, n_kb),                       # reduction (K) axis last
            in_specs=in_specs,
            out_specs=pl.BlockSpec((tm, f_pad), lambda i, k: (i, 0)),
            scratch_shapes=scratch,
        ),
        compiler_params=pltpu.CompilerParams(
            # TODO(synk): on v7x the row axis could use pltpu.CORE_PARALLEL to
            # shard row tiles across the 2 TensorCores; kept "parallel" here for
            # portability across v5e/v6e/v7x.
            dimension_semantics=("parallel", "arbitrary"),
            vmem_limit_bytes=int(vmem_limit),
        ),
        cost_estimate=cost,
    )(*operands)

    return out[:N, :f_out]


if __name__ == "__main__":
    key = jax.random.PRNGKey(0)

    def make_inputs(k, n, f_in, f_out, with_bias):
        k_x, k_adj, k_w, k_b = jax.random.split(k, 4)
        # Deterministic init mirroring reset_parameters(): uniform(-stdv, stdv).
        stdv = 1.0 / math.sqrt(f_out)
        weight = jax.random.uniform(k_w, (f_in, f_out), minval=-stdv, maxval=stdv,
                                    dtype=jnp.float32)
        bias = (jax.random.uniform(k_b, (f_out,), minval=-stdv, maxval=stdv,
                                   dtype=jnp.float32) if with_bias else None)
        x = jax.random.normal(k_x, (n, f_in), dtype=jnp.float32)
        a = jax.random.uniform(k_adj, (n, n), dtype=jnp.float32)
        adj = (a + a.T) * 0.5
        adj = adj / jnp.sum(adj, axis=-1, keepdims=True)
        return x, adj, weight, bias

    def reference(x, adj, weight, bias):
        out = adj @ (x @ weight)
        return (out + bias[None, :]) if bias is not None else out

    # Small shapes consistent with the module; the three configs exercise
    # (1) the multi-K accumulation path, (2) the single-K no-scratch path with
    # clamped "big" tiles, (3) unaligned N with partial blocks + K-edge masking.
    configs = [
        (256, 32, 16, True, 128, 128),
        (256, 32, 16, True, 1024, 2048),
        (200, 32, 16, False, 64, 128),
    ]
    for i, (n, f_in, f_out, with_bias, tm, tk) in enumerate(configs):
        key, sub = jax.random.split(key)
        x, adj, weight, bias = make_inputs(sub, n, f_in, f_out, with_bias)
        out = graph_convolution(x, adj, weight, bias, tm=tm, tk=tk)
        out = jax.block_until_ready(out)
        ref = reference(x, adj, weight, bias)
        assert out.shape == (n, f_out), (out.shape, (n, f_out))
        # adj/support fed to the MXU in bf16 (f32 accumulation) -> relaxed tol.
        assert jnp.allclose(out, ref, atol=2e-2, rtol=2e-2), f"mismatch: config {i}"

    print("KERNEL_OK")
</pallas_src>

<mosaic_0001>
module attributes {stable_mosaic.version = 11 : i64} {
  func.func @_gcn_kernel(%arg0: i32, %arg1: i32, %arg2: memref<128x128xf32, #tpu.memory_space<vmem>>, %arg3: memref<256x128xbf16, #tpu.memory_space<vmem>>, %arg4: memref<1x128xf32, #tpu.memory_space<vmem>>, %arg5: memref<128x128xf32, #tpu.memory_space<vmem>>, %arg6: memref<128x128xf32, #tpu.memory_space<vmem>>) attributes {dimension_semantics = [#tpu.dimension_semantics<parallel>, #tpu.dimension_semantics<arbitrary>], iteration_bounds = array<i64: 2, 2>, scalar_prefetch = 0 : i64, scratch_operands = 1 : i64, tpu.core_type = #tpu.core_type<tc>, window_params = [{transform_indices = @transform_0, window_bounds = array<i64: 128, 128>}, {pipeline_mode = #tpu.pipeline_mode<synchronous>, transform_indices = @transform_1, window_bounds = array<i64: 256, 128>}, {pipeline_mode = #tpu.pipeline_mode<synchronous>, transform_indices = @transform_2, window_bounds = array<i64: 1, 128>}, {transform_indices = @transform_3, window_bounds = array<i64: 128, 128>}]} {
    %c0 = arith.constant 0 : index
    %c0_0 = arith.constant 0 : index
    %0 = vector.load %arg2[%c0, %c0_0] : memref<128x128xf32, #tpu.memory_space<vmem>>, vector<128x128xf32>
    %1 = arith.truncf %0 : vector<128x128xf32> to vector<128x128xbf16>
    %c128_i32 = arith.constant 128 : i32
    %2 = arith.muli %arg1, %c128_i32 : i32
    %3 = tpu.assume_multiple %2, 128 : i32
    %4 = arith.index_cast %3 : i32 to index
    %c0_1 = arith.constant 0 : index
    %5 = vector.load %arg3[%4, %c0_1] : memref<256x128xbf16, #tpu.memory_space<vmem>>, vector<128x128xbf16>
    %cst = arith.constant dense<0.000000e+00> : vector<128x128xf32>
    %6 = tpu.matmul %1, %5, %cst {dimension_numbers = #tpu.dot_dimension_numbers<[1], [0], [0], [1], [0, 0, 1, 1], [], []>} : vector<128x128xbf16>, vector<128x128xbf16>, vector<128x128xf32> -> vector<128x128xf32>
    %c0_i32 = arith.constant 0 : i32
    %7 = arith.cmpi eq, %arg1, %c0_i32 : i32
    %8 = arith.extui %7 : i1 to i32
    %c0_i32_2 = arith.constant 0 : i32
    %9 = arith.cmpi ne, %8, %c0_i32_2 : i32
    scf.if %9 {
      %cst_8 = arith.constant 0.000000e+00 : f32
      %16 = vector.broadcast %cst_8 : f32 to vector<128x128xf32>
      %c0_9 = arith.constant 0 : index
      %c0_10 = arith.constant 0 : index
      %17 = vector.load %arg6[%c0_9, %c0_10] : memref<128x128xf32, #tpu.memory_space<vmem>>, vector<128x128xf32>
      tpu.vector_store %arg6[%c0_9, %c0_10], %16 {strides = array<i32>} : memref<128x128xf32, #tpu.memory_space<vmem>>, vector<128x128xf32>,
    } else {
    }
    %c0_3 = arith.constant 0 : index
    %c0_4 = arith.constant 0 : index
    %10 = vector.load %arg6[%c0_3, %c0_4] : memref<128x128xf32, #tpu.memory_space<vmem>>, vector<128x128xf32>
    %11 = arith.addf %10, %6 : vector<128x128xf32>
    %c0_5 = arith.constant 0 : index
    %c0_6 = arith.constant 0 : index
    %12 = vector.load %arg6[%c0_5, %c0_6] : memref<128x128xf32, #tpu.memory_space<vmem>>, vector<128x128xf32>
    tpu.vector_store %arg6[%c0_5, %c0_6], %11 {strides = array<i32>} : memref<128x128xf32, #tpu.memory_space<vmem>>, vector<128x128xf32>,
    %c1_i32 = arith.constant 1 : i32
    %13 = arith.cmpi eq, %arg1, %c1_i32 : i32
    %14 = arith.extui %13 : i1 to i32
    %c0_i32_7 = arith.constant 0 : i32
    %15 = arith.cmpi ne, %14, %c0_i32_7 : i32
    scf.if %15 {
      %c0_8 = arith.constant 0 : index
      %c0_9 = arith.constant 0 : index
      %16 = vector.load %arg6[%c0_8, %c0_9] : memref<128x128xf32, #tpu.memory_space<vmem>>, vector<128x128xf32>
      %c0_10 = arith.constant 0 : index
      %c0_11 = arith.constant 0 : index
      %17 = vector.load %arg4[%c0_10, %c0_11] : memref<1x128xf32, #tpu.memory_space<vmem>>, vector<1x128xf32>
      %18 = vector.broadcast %17 : vector<1x128xf32> to vector<128x128xf32>
      %19 = arith.addf %16, %18 : vector<128x128xf32>
      %c0_12 = arith.constant 0 : index
      %c0_13 = arith.constant 0 : index
      %20 = vector.load %arg5[%c0_12, %c0_13] : memref<128x128xf32, #tpu.memory_space<vmem>>, vector<128x128xf32>
      tpu.vector_store %arg5[%c0_12, %c0_13], %19 {strides = array<i32>} : memref<128x128xf32, #tpu.memory_space<vmem>>, vector<128x128xf32>,
    } else {
    }
    return
  }
  func.func @transform_0(%arg0: i32, %arg1: i32) -> (i32, i32) {
    %c0_i32 = arith.constant 0 : i32
    return %arg0, %arg1 : i32, i32
  }
  func.func @transform_1(%arg0: i32, %arg1: i32) -> (i32, i32) {
    %c0_i32 = arith.constant 0 : i32
    %c0_i32_0 = arith.constant 0 : i32
    %c0_i32_1 = arith.constant 0 : i32
    return %c0_i32, %c0_i32_0 : i32, i32
  }
  func.func @transform_2(%arg0: i32, %arg1: i32) -> (i32, i32) {
    %c0_i32 = arith.constant 0 : i32
    %c0_i32_0 = arith.constant 0 : i32
    %c0_i32_1 = arith.constant 0 : i32
    return %c0_i32, %c0_i32_0 : i32, i32
  }
  func.func @transform_3(%arg0: i32, %arg1: i32) -> (i32, i32) {
    %c0_i32 = arith.constant 0 : i32
    %c0_i32_0 = arith.constant 0 : i32
    return %arg0, %c0_i32 : i32, i32
  }
}

</mosaic_0001>

<llo_original>
// kernel: tpu_custom_call.1
$region0: #{tpu_custom_call.1}
  #allocation0 [shape = 'u32[]', space=smem, size = 0x4, offset = 0x4, fixed_abs, tag = 'smem constant byte address 0x4 - core index']
  #allocation1 [shape = 'u32[144,128]{1,0:T(1,128)}', space=vmem, size = 0x12000, scoped, tag = 'internal scratch']
  #allocation2 [shape = 'f32[128,128]{1,0:T(8,128)}', space=vmem, size = 0x10000, scoped, tag = 'scratch operand']
  %s0 = inlined_call_operand.hbm [shape: f32[256,256], index: 0, kind: input, shape index: {}]
  %s1 = inlined_call_operand.hbm [shape: bf16[256,128], index: 1, kind: input, shape index: {}]
  %s2 = inlined_call_operand.vmem [shape: f32[1,128], index: 2, kind: input, shape index: {}]
  %s3 = inlined_call_operand.hbm [shape: f32[256,128], index: 3, kind: output, shape index: {}]
  %s4 = sld [smem:[#allocation0]]
  $region61: #{tpu_custom_call.1} parent=0
    _
  %s6 = ssub.s32 1, %s4
  %s7 = scalar_select 0, %s6, %s4
  $region1: #{tpu_custom_call.1} parent=0
    #allocation3 [shape = 'u8[131072]{0}', space=vmem, size = 0x20000, scoped, tag = 'input window, operand 0']
    #allocation4 [shape = 's32[2]{0}', space=sflag, size = 0x8, scoped, tag = 'scoped memory for tpu_custom_call.1']
    #allocation5 [shape = 's32[2]{0}', space=sflag, size = 0x8, scoped, tag = 'scoped memory for tpu_custom_call.1']
    #allocation6 [shape = 'u8[65536]{0}', space=vmem, size = 0x10000, scoped, tag = 'input window, operand 1, single buffered']
    #allocation7 [shape = 's32[1]{0}', space=sflag, size = 0x4, scoped, tag = 'scoped memory for tpu_custom_call.1']
    #allocation8 [shape = 'u8[131072]{0}', space=vmem, size = 0x20000, scoped, tag = 'output window, operand 0']
    %8 = vsyncpa [#allocation4], 0
    %s9 = scalar_lea.sflag [#allocation4], 1
    %10 = vsyncpa %s9, 0
    %11 = vsyncpa [#allocation7], 0
    %12 = vsyncpa [#allocation5], 0
    %s13 = scalar_lea.sflag [#allocation5], 1
    %14 = vsyncpa %s13, 0
    loop: start=0, step=1, limit=6
    $region2: #{tpu_custom_call.1} parent=1 // loop_pre_header
      _
    $region3: #{tpu_custom_call.1} parent=1 // loop_header
      %s16 = sphi 0, %s20
      %p17 = scmp.ge.s32.totalorder %s16, 6
      %s23 = sphi 0, %s35
      %s24 = sphi 0, %s31
      %s25 = sphi 0, %s23
      %s26 = sphi 0, %s24
      %s27 = sphi 0, %s25
      %s28 = sphi 0, %s26
      %s40 = sphi 0, %s42
      %s43 = sphi 0, %s40
      %s44 = sphi 0, %s43
      %s60 = sphi 0, %s44
      %s64 = sphi 0, %s64
      %s66 = sphi 0, %s64
      %s67 = sphi 0, %s66
      %s81 = sphi 0, %s67
      %s85 = sphi 0, %s85
      %s87 = sphi 0, %s85
      %s88 = sphi 0, %s87
      %s102 = sphi 0, %s88
      %s108 = sphi 0, %s110
      %s111 = sphi 0, %s108
      %s112 = sphi 0, %s111
      %s128 = sphi 0, %s112
    $region4: #{tpu_custom_call.1} parent=1 // loop_header_branch
      %19 = sbr.rel (%p17) target = $region8
    $region5: #{tpu_custom_call.1} parent=1 // loop_body
      %s21 = ssub.s32 %s16, 1
      %s22 = ssub.s32 %s16, 2
      %s29 = sadd.s32 1, %s24
      %p30 = scmp.ge.s32.totalorder %s29, 2
      %s31 = scalar_select %p30, 0, %s29
      %s32 = sadd.s32 1, %s23
      %s33 = scalar_select %p30, %s32, %s23
      %p34 = scmp.ge.s32.totalorder %s33, 2
      %s35 = scalar_select %p34, 0, %s33
      %s36 = ssub.s32 %s23, %s35
      %s37 = ssub.s32 %s24, %s31
      %s38 = sor.u32 %s36, %s37
      %p39 = scmp.eq.s32.totalorder %s38, 0
      %s41 = sadd.s32 %s40, 1
      %s42 = scalar_select %p39, %s40, %s41
      %p45 = pneg %p39
      %p46 = scmp.eq.s32.totalorder %s16, 3
      %p47 = por %p45, %p46
      %p48 = scmp.ne.s32.totalorder %s40, %s43
      %p49 = scmp.eq.s32.totalorder %s16, 0
      %p50 = por %p48, %p49
      %p51 = scmp.ne.s32.totalorder %s40, %s43
      %p52 = scmp.eq.s32.totalorder %s21, 3
      %p53 = por %p51, %p52
      %p54 = scmp.ne.s32.totalorder %s43, %s44
      %p55 = scmp.eq.s32.totalorder %s21, 0
      %p56 = por %p54, %p55
      %p57 = scmp.ne.s32.totalorder %s43, %s44
      %p58 = scmp.eq.s32.totalorder %s22, 3
      %p59 = por %p57, %p58
      %p61 = scmp.ne.s32.totalorder %s44, %s60
      %p62 = scmp.eq.s32.totalorder %s22, 0
      %p63 = por %p61, %p62
      %s65 = sadd.s32 %s64, 1
      %p68 = scmp.eq.s32.totalorder %s16, 3
      %p69 = scmp.ne.s32.totalorder %s64, %s66
      %p70 = scmp.eq.s32.totalorder %s16, 0
      %p71 = por %p69, %p70
      %p72 = scmp.ne.s32.totalorder %s64, %s66
      %p73 = scmp.eq.s32.totalorder %s21, 3
      %p74 = por %p72, %p73
      %p75 = scmp.ne.s32.totalorder %s66, %s67
      %p76 = scmp.eq.s32.totalorder %s21, 0
      %p77 = por %p75, %p76
      %p78 = scmp.ne.s32.totalorder %s66, %s67
      %p79 = scmp.eq.s32.totalorder %s22, 3
      %p80 = por %p78, %p79
      %p82 = scmp.ne.s32.totalorder %s67, %s81
      %p83 = scmp.eq.s32.totalorder %s22, 0
      %p84 = por %p82, %p83
      %s86 = sadd.s32 %s85, 1
      %p89 = scmp.eq.s32.totalorder %s16, 3
      %p90 = scmp.ne.s32.totalorder %s85, %s87
      %p91 = scmp.eq.s32.totalorder %s16, 0
      %p92 = por %p90, %p91
      %p93 = scmp.ne.s32.totalorder %s85, %s87
      %p94 = scmp.eq.s32.totalorder %s21, 3
      %p95 = por %p93, %p94
      %p96 = scmp.ne.s32.totalorder %s87, %s88
      %p97 = scmp.eq.s32.totalorder %s21, 0
      %p98 = por %p96, %p97
      %p99 = scmp.ne.s32.totalorder %s87, %s88
      %p100 = scmp.eq.s32.totalorder %s22, 3
      %p101 = por %p99, %p100
      %p103 = scmp.ne.s32.totalorder %s88, %s102
      %p104 = scmp.eq.s32.totalorder %s22, 0
      %p105 = por %p103, %p104
      %s106 = ssub.s32 %s23, %s35
      %p107 = scmp.eq.s32.totalorder %s106, 0
      %s109 = sadd.s32 %s108, 1
      %s110 = scalar_select %p107, %s108, %s109
      %p113 = pneg %p107
      %p114 = scmp.eq.s32.totalorder %s16, 3
      %p115 = por %p113, %p114
      %p116 = scmp.ne.s32.totalorder %s108, %s111
      %p117 = scmp.eq.s32.totalorder %s16, 0
      %p118 = por %p116, %p117
      %p119 = scmp.ne.s32.totalorder %s108, %s111
      %p120 = scmp.eq.s32.totalorder %s21, 3
      %p121 = por %p119, %p120
      %p122 = scmp.ne.s32.totalorder %s111, %s112
      %p123 = scmp.eq.s32.totalorder %s21, 0
      %p124 = por %p122, %p123
      %p125 = scmp.ne.s32.totalorder %s111, %s112
      %p126 = scmp.eq.s32.totalorder %s22, 3
      %p127 = por %p125, %p126
      %p129 = scmp.ne.s32.totalorder %s112, %s128
      %p130 = scmp.eq.s32.totalorder %s22, 0
      %p131 = por %p129, %p130
      %p132 = scmp.le.s32.totalorder 1, %s16
      %p133 = scmp.lt.s32.totalorder %s16, 5
      %p134 = pnand %p132, %p133
      %p135 = pneg %p134
      // Predicated region
      $region9: #{tpu_custom_call.1} parent=5 // pred_check
        _
      $region10: #{tpu_custom_call.1} parent=5 // pred_check_branch
        %137 = sbr.rel (%p134) target = $region12
      $region11: #{tpu_custom_call.1} parent=5 // pred_region
        %s138 = ssub.s32 %s16, 1
        // Predicated region
        $region13: #{tpu_custom_call.1} parent=11 // pred_check
          %p139 = pneg %p77
        $region14: #{tpu_custom_call.1} parent=11 // pred_check_branch
          %141 = sbr.rel (%p139) target = $region16
        $region15: #{tpu_custom_call.1} parent=11 // pred_region
          %s143 = ssub.s32 2048, 2048
          %144 = vsyncadd [#allocation7], %s143
          %s145 = sshll.u32 [#allocation6], 4
          %s146 = int_to_ptr.vmem [resolvable:$true] %s145
          %151 = dma.hbm_to_vmem [thread:$0]  %s1, 2048, %s146, [#allocation7], 64, 64, 4
        $region16: #{tpu_custom_call.1} parent=11 // pred_fallthru
          _
        // Predicated region
        $region17: #{tpu_custom_call.1} parent=11 // pred_check
          %p152 = pneg %p98
        $region18: #{tpu_custom_call.1} parent=11 // pred_check_branch
          %154 = sbr.rel (%p152) target = $region20
        $region19: #{tpu_custom_call.1} parent=11 // pred_region
          _
        $region20: #{tpu_custom_call.1} parent=11 // pred_fallthru
          _
      $region12: #{tpu_custom_call.1} parent=5 // pred_fallthru
        _
      %p155 = scmp.lt.s32.totalorder %s16, 4
      // Predicated region
      $region21: #{tpu_custom_call.1} parent=5 // pred_check
        %p156 = pneg %p155
      $region22: #{tpu_custom_call.1} parent=5 // pred_check_branch
        %158 = sbr.rel (%p156) target = $region24
      $region23: #{tpu_custom_call.1} parent=5 // pred_region
        // Predicated region
        $region25: #{tpu_custom_call.1} parent=23 // pred_check
          %p159 = pneg %p50
        $region26: #{tpu_custom_call.1} parent=23 // pred_check_branch
          %161 = sbr.rel (%p159) target = $region28
        $region27: #{tpu_custom_call.1} parent=23 // pred_region
          %s162 = sand.u32 %s40, 1
          %s163 = scalar_lea.sflag [#allocation4], %s162
          %s164 = sand.u32 %s40, 1
          %s165 = smul.addr %s164, 128
          %s166 = scalar_lea.vmem [#allocation3], %s165
          %s167 = smul.u32 16, %s23
          %s169 = ssub.s32 2048, 2048
          %170 = vsyncadd %s163, %s169
          %s171 = smul.addr %s167, 2
          %s172 = sadd.s32 %s24, %s171
          %s173 = smul.addr %s172, 128
          %s174 = scalar_lea.hbm %s0, %s173
          %s175 = sshll.u32 %s166, 4
          %s176 = int_to_ptr.vmem [resolvable:$true] %s175
          %181 = dma.hbm_to_vmem [thread:$0]  %s174, 2048, %s176, %s163, 256, 128, 8
        $region28: #{tpu_custom_call.1} parent=23 // pred_fallthru
          _
      $region24: #{tpu_custom_call.1} parent=5 // pred_fallthru
        _
      %p182 = scmp.le.s32.totalorder 1, %s16
      %p183 = scmp.lt.s32.totalorder %s16, 5
      %p184 = pnand %p182, %p183
      %p185 = pneg %p184
      // Predicated region
      $region29: #{tpu_custom_call.1} parent=5 // pred_check
        _
      $region30: #{tpu_custom_call.1} parent=5 // pred_check_branch
        %187 = sbr.rel (%p184) target = $region32
      $region31: #{tpu_custom_call.1} parent=5 // pred_region
        %s188 = ssub.s32 %s16, 1
        %s189 = sand.u32 %s43, 1
        %s190 = scalar_lea.sflag [#allocation4], %s189
        %s191 = sand.u32 %s43, 1
        %s192 = smul.addr %s191, 128
        %s193 = scalar_lea.vmem [#allocation3], %s192
        // Predicated region
        $region33: #{tpu_custom_call.1} parent=31 // pred_check
          %p194 = pneg %p56
        $region34: #{tpu_custom_call.1} parent=31 // pred_check_branch
          %196 = sbr.rel (%p194) target = $region36
        $region35: #{tpu_custom_call.1} parent=31 // pred_region
          %197 = dma.done %s190, 2048
        $region36: #{tpu_custom_call.1} parent=31 // pred_fallthru
          _
        // Predicated region
        $region37: #{tpu_custom_call.1} parent=31 // pred_check
          %p198 = pneg %p77
        $region38: #{tpu_custom_call.1} parent=31 // pred_check_branch
          %200 = sbr.rel (%p198) target = $region40
        $region39: #{tpu_custom_call.1} parent=31 // pred_region
          %201 = dma.done [#allocation7], 2048
        $region40: #{tpu_custom_call.1} parent=31 // pred_fallthru
          _
        %s202 = sand.u32 %s43, 1
        %s203 = scalar_lea.sflag [#allocation4], %s202
        %s204 = sand.u32 %s43, 1
        %s205 = smul.addr %s204, 128
        %s206 = scalar_lea.vmem [#allocation3], %s205
        %p207 = pneg %p56
        %p208 = pneg %p53
        %p209 = pneg %p77
        %p210 = pneg %p74
        %p211 = pneg %p98
        %p212 = pneg %p95
        %p213 = pneg %p124
        %p214 = pneg %p121
        %s215 = sand.u32 %s111, 1
        %s216 = scalar_lea.sflag [#allocation5], %s215
        %s217 = sand.u32 %s111, 1
        %s218 = smul.addr %s217, 128
        %s219 = scalar_lea.vmem [#allocation8], %s218
        %s220 = smul.u32 16, %s25
        %s221 = smul.u32 16, %s25
        %v223 = vld [vmem:[%s193] sm:$0xff]
        %v224 = vld [vmem:[%s193 + $0x8] sm:$0xff]
        %v225 = vld [vmem:[%s193 + $0x10] sm:$0xff]
        %v226 = vld [vmem:[%s193 + $0x18] sm:$0xff]
        %v227 = vld [vmem:[%s193 + $0x20] sm:$0xff]
        %v228 = vld [vmem:[%s193 + $0x28] sm:$0xff]
        %v229 = vld [vmem:[%s193 + $0x30] sm:$0xff]
        %v230 = vld [vmem:[%s193 + $0x38] sm:$0xff]
        %v231 = vld [vmem:[%s193 + $0x40] sm:$0xff]
        %v232 = vld [vmem:[%s193 + $0x48] sm:$0xff]
        %v233 = vld [vmem:[%s193 + $0x50] sm:$0xff]
        %v234 = vld [vmem:[%s193 + $0x58] sm:$0xff]
        %v235 = vld [vmem:[%s193 + $0x60] sm:$0xff]
        %v236 = vld [vmem:[%s193 + $0x68] sm:$0xff]
        %v237 = vld [vmem:[%s193 + $0x70] sm:$0xff]
        %v238 = vld [vmem:[%s193 + $0x78] sm:$0xff]
        %v239 = vpack.c.bf16 %v224, %v223
        %v240 = vpack.c.bf16 %v226, %v225
        %v241 = vpack.c.bf16 %v228, %v227
        %v242 = vpack.c.bf16 %v230, %v229
        %v243 = vpack.c.bf16 %v232, %v231
        %v244 = vpack.c.bf16 %v234, %v233
        %v245 = vpack.c.bf16 %v236, %v235
        %v246 = vpack.c.bf16 %v238, %v237
        %s247 = smul.u32 %s26, 128
        %s248 = sshra.s32 %s247, 3
        %s249 = sand.u32 %s247, 7
        %s250 = smul.addr %s248, 4
        %s251 = scalar_lea.vmem [#allocation6], %s250
        %v252 = vld [vmem:[%s251] sm:$0xf]
        %v253 = vld [vmem:[%s251 + $0x4] sm:$0xf]
        %v254 = vld [vmem:[%s251 + $0x8] sm:$0xf]
        %v255 = vld [vmem:[%s251 + $0xc] sm:$0xf]
        %v256 = vld [vmem:[%s251 + $0x10] sm:$0xf]
        %v257 = vld [vmem:[%s251 + $0x14] sm:$0xf]
        %v258 = vld [vmem:[%s251 + $0x18] sm:$0xf]
        %v259 = vld [vmem:[%s251 + $0x1c] sm:$0xf]
        %v260 = vld [vmem:[%s251 + $0x20] sm:$0xf]
        %v261 = vld [vmem:[%s251 + $0x24] sm:$0xf]
        %v262 = vld [vmem:[%s251 + $0x28] sm:$0xf]
        %v263 = vld [vmem:[%s251 + $0x2c] sm:$0xf]
        %v264 = vld [vmem:[%s251 + $0x30] sm:$0xf]
        %v265 = vld [vmem:[%s251 + $0x34] sm:$0xf]
        %v266 = vld [vmem:[%s251 + $0x38] sm:$0xf]
        %v267 = vld [vmem:[%s251 + $0x3c] sm:$0xf]
        %v284 = vunpack.c.l.b16 %v252
        %v285 = vunpack.c.l.b16 %v253
        %v286 = vunpack.c.l.b16 %v254
        %v287 = vunpack.c.l.b16 %v255
        %v288 = vunpack.c.l.b16 %v256
        %v289 = vunpack.c.l.b16 %v257
        %v290 = vunpack.c.l.b16 %v258
        %v291 = vunpack.c.l.b16 %v259
        %v292 = vunpack.c.l.b16 %v260
        %v293 = vunpack.c.l.b16 %v261
        %v294 = vunpack.c.l.b16 %v262
        %v295 = vunpack.c.l.b16 %v263
        %v296 = vunpack.c.l.b16 %v264
        %v297 = vunpack.c.l.b16 %v265
        %v298 = vunpack.c.l.b16 %v266
        %v299 = vunpack.c.l.b16 %v267
        %v300 = vpack.c.b16 %v285, %v284
        %v301 = vpack.c.b16 %v287, %v286
        %v302 = vpack.c.b16 %v289, %v288
        %v303 = vpack.c.b16 %v291, %v290
        %v304 = vpack.c.b16 %v293, %v292
        %v305 = vpack.c.b16 %v295, %v294
        %v306 = vpack.c.b16 %v297, %v296
        %v307 = vpack.c.b16 %v299, %v298
        %316 = vmatprep.subr.bf16.mxu0 0
        %317 = vmatpush1.bf16.msra.mxu0 %v300
        %318 = vmatprep.subr.bf16.mxu0 0
        %319 = vmatpush1.bf16.msra.mxu0 %v301
        %320 = vmatprep.subr.bf16.mxu0 0
        %321 = vmatpush1.bf16.msra.mxu0 %v302
        %322 = vmatprep.subr.bf16.mxu0 0
        %323 = vmatpush1.bf16.msra.mxu0 %v303
        %324 = vmatprep.subr.bf16.mxu0 0
        %325 = vmatpush1.bf16.msra.mxu0 %v304
        %326 = vmatprep.subr.bf16.mxu0 0
        %327 = vmatpush1.bf16.msra.mxu0 %v305
        %328 = vmatprep.subr.bf16.mxu0 0
        %329 = vmatpush1.bf16.msra.mxu0 %v306
        %330 = vmatprep.subr.bf16.mxu0 0
        %331 = vmatpush1.bf16.msra.mxu0 %v307
        %332 = vmatprep.subr.bf16.mxu0 0
        %333 = vmatpush1.bf16.msra.mxu0 0
        %334 = vmatprep.subr.bf16.mxu0 0
        %335 = vmatpush1.bf16.msra.mxu0 0
        %336 = vmatprep.subr.bf16.mxu0 0
        %337 = vmatpush1.bf16.msra.mxu0 0
        %338 = vmatprep.subr.bf16.mxu0 0
        %339 = vmatpush1.bf16.msra.mxu0 0
        %340 = vmatprep.subr.bf16.mxu0 0
        %341 = vmatpush1.bf16.msra.mxu0 0
        %342 = vmatprep.subr.bf16.mxu0 0
        %343 = vmatpush1.bf16.msra.mxu0 0
        %344 = vmatprep.subr.bf16.mxu0 0
        %345 = vmatpush1.bf16.msra.mxu0 0
        %346 = vmatprep.subr.bf16.mxu0 0
        %347 = vmatpush1.bf16.msra.mxu0 0
        %348 = vmatprep.mubr.bf16.mxu0 0
        %349 = vmatmul.mubr.bf16.gmra.mrb[0].mxu0 %v239
        %v350 = vpop.f32.mrb[0].mxu0
        %v351 = vadd.f32 0.0, %v350
        %v352 = vpop.f32.mrb[0].mxu0
        %v353 = vpop.f32.mrb[0].mxu0
        %v354 = vadd.f32 0.0, %v353
        %v355 = vpop.f32.mrb[0].mxu0
        %356 = vmatprep.mubr.bf16.mxu0 0
        %357 = vmatmul.mubr.bf16.gmra.mrb[0].mxu0 %v240
        %v358 = vpop.f32.mrb[0].mxu0
        %v359 = vadd.f32 0.0, %v358
        %v360 = vpop.f32.mrb[0].mxu0
        %v361 = vpop.f32.mrb[0].mxu0
        %v362 = vadd.f32 0.0, %v361
        %v363 = vpop.f32.mrb[0].mxu0
        %364 = vmatprep.mubr.bf16.mxu0 0
        %365 = vmatmul.mubr.bf16.gmra.mrb[0].mxu0 %v241
        %v366 = vpop.f32.mrb[0].mxu0
        %v367 = vadd.f32 0.0, %v366
        %v368 = vpop.f32.mrb[0].mxu0
        %v369 = vpop.f32.mrb[0].mxu0
        %v370 = vadd.f32 0.0, %v369
        %v371 = vpop.f32.mrb[0].mxu0
        %372 = vmatprep.mubr.bf16.mxu0 0
        %373 = vmatmul.mubr.bf16.gmra.mrb[0].mxu0 %v242
        %v374 = vpop.f32.mrb[0].mxu0
        %v375 = vadd.f32 0.0, %v374
        %v376 = vpop.f32.mrb[0].mxu0
        %v377 = vpop.f32.mrb[0].mxu0
        %v378 = vadd.f32 0.0, %v377
        %v379 = vpop.f32.mrb[0].mxu0
        %380 = vmatprep.mubr.bf16.mxu0 0
        %381 = vmatmul.mubr.bf16.gmra.mrb[0].mxu0 %v243
        %v382 = vpop.f32.mrb[0].mxu0
        %v383 = vadd.f32 0.0, %v382
        %v384 = vpop.f32.mrb[0].mxu0
        %v385 = vpop.f32.mrb[0].mxu0
        %v386 = vadd.f32 0.0, %v385
        %v387 = vpop.f32.mrb[0].mxu0
        %388 = vmatprep.mubr.bf16.mxu0 0
        %389 = vmatmul.mubr.bf16.gmra.mrb[0].mxu0 %v244
        %v390 = vpop.f32.mrb[0].mxu0
        %v391 = vadd.f32 0.0, %v390
        %v392 = vpop.f32.mrb[0].mxu0
        %v393 = vpop.f32.mrb[0].mxu0
        %v394 = vadd.f32 0.0, %v393
        %v395 = vpop.f32.mrb[0].mxu0
        %396 = vmatprep.mubr.bf16.mxu0 0
        %397 = vmatmul.mubr.bf16.gmra.mrb[0].mxu0 %v245
        %v398 = vpop.f32.mrb[0].mxu0
        %v399 = vadd.f32 0.0, %v398
        %v400 = vpop.f32.mrb[0].mxu0
        %v401 = vpop.f32.mrb[0].mxu0
        %v402 = vadd.f32 0.0, %v401
        %v403 = vpop.f32.mrb[0].mxu0
        %404 = vmatprep.mubr.bf16.mxu0 0
        %405 = vmatmul.mubr.bf16.gmra.mrb[0].mxu0 %v246
        %v406 = vpop.f32.mrb[0].mxu0
        %v407 = vadd.f32 0.0, %v406
        %v408 = vpop.f32.mrb[0].mxu0
        %v409 = vpop.f32.mrb[0].mxu0
        %v410 = vadd.f32 0.0, %v409
        %v411 = vpop.f32.mrb[0].mxu0
        %412 = vdwg.mxu0
        %p413 = scmp.eq.s32.totalorder %s26, 0
        // Predicated region
        $region41: #{tpu_custom_call.1} parent=31 // pred_check
          %p414 = pneg %p413
        $region42: #{tpu_custom_call.1} parent=31 // pred_check_branch
          %416 = sbr.rel (%p414) target = $region44
        $region43: #{tpu_custom_call.1} parent=31 // pred_region
          %417 = vst [vmem:[#allocation2] sm:$0xff] 0.0
          %418 = vst [vmem:[#allocation2 + $0x8] sm:$0xff] 0.0
          %419 = vst [vmem:[#allocation2 + $0x10] sm:$0xff] 0.0
          %420 = vst [vmem:[#allocation2 + $0x18] sm:$0xff] 0.0
          %421 = vst [vmem:[#allocation2 + $0x20] sm:$0xff] 0.0
          %422 = vst [vmem:[#allocation2 + $0x28] sm:$0xff] 0.0
          %423 = vst [vmem:[#allocation2 + $0x30] sm:$0xff] 0.0
          %424 = vst [vmem:[#allocation2 + $0x38] sm:$0xff] 0.0
          %425 = vst [vmem:[#allocation2 + $0x40] sm:$0xff] 0.0
          %426 = vst [vmem:[#allocation2 + $0x48] sm:$0xff] 0.0
          %427 = vst [vmem:[#allocation2 + $0x50] sm:$0xff] 0.0
          %428 = vst [vmem:[#allocation2 + $0x58] sm:$0xff] 0.0
          %429 = vst [vmem:[#allocation2 + $0x60] sm:$0xff] 0.0
          %430 = vst [vmem:[#allocation2 + $0x68] sm:$0xff] 0.0
          %431 = vst [vmem:[#allocation2 + $0x70] sm:$0xff] 0.0
          %432 = vst [vmem:[#allocation2 + $0x78] sm:$0xff] 0.0
        $region44: #{tpu_custom_call.1} parent=31 // pred_fallthru
          _
        %v433 = vld [vmem:[#allocation2] sm:$0xff]
        %v434 = vld [vmem:[#allocation2 + $0x8] sm:$0xff]
        %v435 = vld [vmem:[#allocation2 + $0x10] sm:$0xff]
        %v436 = vld [vmem:[#allocation2 + $0x18] sm:$0xff]
        %v437 = vld [vmem:[#allocation2 + $0x20] sm:$0xff]
        %v438 = vld [vmem:[#allocation2 + $0x28] sm:$0xff]
        %v439 = vld [vmem:[#allocation2 + $0x30] sm:$0xff]
        %v440 = vld [vmem:[#allocation2 + $0x38] sm:$0xff]
        %v441 = vld [vmem:[#allocation2 + $0x40] sm:$0xff]
        %v442 = vld [vmem:[#allocation2 + $0x48] sm:$0xff]
        %v443 = vld [vmem:[#allocation2 + $0x50] sm:$0xff]
        %v444 = vld [vmem:[#allocation2 + $0x58] sm:$0xff]
        %v445 = vld [vmem:[#allocation2 + $0x60] sm:$0xff]
        %v446 = vld [vmem:[#allocation2 + $0x68] sm:$0xff]
        %v447 = vld [vmem:[#allocation2 + $0x70] sm:$0xff]
        %v448 = vld [vmem:[#allocation2 + $0x78] sm:$0xff]
        %v449 = vadd.f32 %v433, %v351
        %v450 = vadd.f32 %v434, %v354
        %v451 = vadd.f32 %v435, %v359
        %v452 = vadd.f32 %v436, %v362
        %v453 = vadd.f32 %v437, %v367
        %v454 = vadd.f32 %v438, %v370
        %v455 = vadd.f32 %v439, %v375
        %v456 = vadd.f32 %v440, %v378
        %v457 = vadd.f32 %v441, %v383
        %v458 = vadd.f32 %v442, %v386
        %v459 = vadd.f32 %v443, %v391
        %v460 = vadd.f32 %v444, %v394
        %v461 = vadd.f32 %v445, %v399
        %v462 = vadd.f32 %v446, %v402
        %v463 = vadd.f32 %v447, %v407
        %v464 = vadd.f32 %v448, %v410
        %465 = vst [vmem:[#allocation2] sm:$0xff] %v449
        %466 = vst [vmem:[#allocation2 + $0x8] sm:$0xff] %v450
        %467 = vst [vmem:[#allocation2 + $0x10] sm:$0xff] %v451
        %468 = vst [vmem:[#allocation2 + $0x18] sm:$0xff] %v452
        %469 = vst [vmem:[#allocation2 + $0x20] sm:$0xff] %v453
        %470 = vst [vmem:[#allocation2 + $0x28] sm:$0xff] %v454
        %471 = vst [vmem:[#allocation2 + $0x30] sm:$0xff] %v455
        %472 = vst [vmem:[#allocation2 + $0x38] sm:$0xff] %v456
        %473 = vst [vmem:[#allocation2 + $0x40] sm:$0xff] %v457
        %474 = vst [vmem:[#allocation2 + $0x48] sm:$0xff] %v458
        %475 = vst [vmem:[#allocation2 + $0x50] sm:$0xff] %v459
        %476 = vst [vmem:[#allocation2 + $0x58] sm:$0xff] %v460
        %477 = vst [vmem:[#allocation2 + $0x60] sm:$0xff] %v461
        %478 = vst [vmem:[#allocation2 + $0x68] sm:$0xff] %v462
        %479 = vst [vmem:[#allocation2 + $0x70] sm:$0xff] %v463
        %480 = vst [vmem:[#allocation2 + $0x78] sm:$0xff] %v464
        %p481 = scmp.eq.s32.totalorder %s26, 1
        // Predicated region
        $region45: #{tpu_custom_call.1} parent=31 // pred_check
          %p482 = pneg %p481
        $region46: #{tpu_custom_call.1} parent=31 // pred_check_branch
          %484 = sbr.rel (%p482) target = $region48
        $region47: #{tpu_custom_call.1} parent=31 // pred_region
          %v485 = vld [vmem:[#allocation2] sm:$0xff]
          %v486 = vld [vmem:[#allocation2 + $0x8] sm:$0xff]
          %v487 = vld [vmem:[#allocation2 + $0x10] sm:$0xff]
          %v488 = vld [vmem:[#allocation2 + $0x18] sm:$0xff]
          %v489 = vld [vmem:[#allocation2 + $0x20] sm:$0xff]
          %v490 = vld [vmem:[#allocation2 + $0x28] sm:$0xff]
          %v491 = vld [vmem:[#allocation2 + $0x30] sm:$0xff]
          %v492 = vld [vmem:[#allocation2 + $0x38] sm:$0xff]
          %v493 = vld [vmem:[#allocation2 + $0x40] sm:$0xff]
          %v494 = vld [vmem:[#allocation2 + $0x48] sm:$0xff]
          %v495 = vld [vmem:[#allocation2 + $0x50] sm:$0xff]
          %v496 = vld [vmem:[#allocation2 + $0x58] sm:$0xff]
          %v497 = vld [vmem:[#allocation2 + $0x60] sm:$0xff]
          %v498 = vld [vmem:[#allocation2 + $0x68] sm:$0xff]
          %v499 = vld [vmem:[#allocation2 + $0x70] sm:$0xff]
          %v500 = vld [vmem:[#allocation2 + $0x78] sm:$0xff]
          %v501 = vld [vmem:[%s2] sm:$0x1]
          %v503 = vlaneseq
          %v504 = vshrl.u32 %v503, 7
          %v505 = vsub.s32 0, %v504
          %v506 = vrot.slane %v501, %v505
          %v508 = vadd.f32 %v485, %v506
          %v509 = vadd.f32 %v486, %v506
          %v510 = vadd.f32 %v487, %v506
          %v511 = vadd.f32 %v488, %v506
          %v512 = vadd.f32 %v489, %v506
          %v513 = vadd.f32 %v490, %v506
          %v514 = vadd.f32 %v491, %v506
          %v515 = vadd.f32 %v492, %v506
          %v516 = vadd.f32 %v493, %v506
          %v517 = vadd.f32 %v494, %v506
          %v518 = vadd.f32 %v495, %v506
          %v519 = vadd.f32 %v496, %v506
          %v520 = vadd.f32 %v497, %v506
          %v521 = vadd.f32 %v498, %v506
          %v522 = vadd.f32 %v499, %v506
          %v523 = vadd.f32 %v500, %v506
          %524 = vst [vmem:[%s219] sm:$0xff] %v508
          %525 = vst [vmem:[%s219 + $0x8] sm:$0xff] %v509
          %526 = vst [vmem:[%s219 + $0x10] sm:$0xff] %v510
          %527 = vst [vmem:[%s219 + $0x18] sm:$0xff] %v511
          %528 = vst [vmem:[%s219 + $0x20] sm:$0xff] %v512
          %529 = vst [vmem:[%s219 + $0x28] sm:$0xff] %v513
          %530 = vst [vmem:[%s219 + $0x30] sm:$0xff] %v514
          %531 = vst [vmem:[%s219 + $0x38] sm:$0xff] %v515
          %532 = vst [vmem:[%s219 + $0x40] sm:$0xff] %v516
          %533 = vst [vmem:[%s219 + $0x48] sm:$0xff] %v517
          %534 = vst [vmem:[%s219 + $0x50] sm:$0xff] %v518
          %535 = vst [vmem:[%s219 + $0x58] sm:$0xff] %v519
          %536 = vst [vmem:[%s219 + $0x60] sm:$0xff] %v520
          %537 = vst [vmem:[%s219 + $0x68] sm:$0xff] %v521
          %538 = vst [vmem:[%s219 + $0x70] sm:$0xff] %v522
          %539 = vst [vmem:[%s219 + $0x78] sm:$0xff] %v523
        $region48: #{tpu_custom_call.1} parent=31 // pred_fallthru
          _
        %s540 = sand.u32 %s111, 1
        %s541 = scalar_lea.sflag [#allocation5], %s540
        %s542 = sand.u32 %s111, 1
        %s543 = smul.addr %s542, 128
        %s544 = scalar_lea.vmem [#allocation8], %s543
        // Predicated region
        $region49: #{tpu_custom_call.1} parent=31 // pred_check
          %p545 = pneg %p121
        $region50: #{tpu_custom_call.1} parent=31 // pred_check_branch
          %547 = sbr.rel (%p545) target = $region52
        $region51: #{tpu_custom_call.1} parent=31 // pred_region
          %s548 = smul.u32 16, %s25
          %s550 = ssub.s32 2048, 2048
          %551 = vsyncadd %s541, %s550
          %s552 = smul.addr %s548, 128
          %s553 = scalar_lea.hbm %s3, %s552
          %s554 = sshll.u32 %s544, 4
          %s555 = int_to_ptr.vmem [resolvable:$true] %s554
          %560 = dma.vmem_to_hbm [thread:$0]  %s555, 2048, %s553, %s541, 128, 128, 8
        $region52: #{tpu_custom_call.1} parent=31 // pred_fallthru
          _
      $region32: #{tpu_custom_call.1} parent=5 // pred_fallthru
        _
      %p561 = scmp.le.s32.totalorder 2, %s16
      // Predicated region
      $region53: #{tpu_custom_call.1} parent=5 // pred_check
        %p562 = pneg %p561
      $region54: #{tpu_custom_call.1} parent=5 // pred_check_branch
        %564 = sbr.rel (%p562) target = $region56
      $region55: #{tpu_custom_call.1} parent=5 // pred_region
        %s565 = ssub.s32 %s16, 2
        // Predicated region
        $region57: #{tpu_custom_call.1} parent=55 // pred_check
          %p566 = pneg %p127
        $region58: #{tpu_custom_call.1} parent=55 // pred_check_branch
          %568 = sbr.rel (%p566) target = $region60
        $region59: #{tpu_custom_call.1} parent=55 // pred_region
          %s569 = sand.u32 %s112, 1
          %s570 = scalar_lea.sflag [#allocation5], %s569
          %s571 = sand.u32 %s112, 1
          %s572 = smul.addr %s571, 128
          %s573 = scalar_lea.vmem [#allocation8], %s572
          %574 = dma.done %s570, 2048
        $region60: #{tpu_custom_call.1} parent=55 // pred_fallthru
          _
      $region56: #{tpu_custom_call.1} parent=5 // pred_fallthru
        _
    $region6: #{tpu_custom_call.1} parent=1 // loop_footer
      %s20 = sadd.s32 1, %s16
    $region7: #{tpu_custom_call.1} parent=1 // loop_footer_branch
      %15 = sbr.rel target = $region3
    $region8: #{tpu_custom_call.1} parent=1 // loop_exit
      _
    %575 = vsyncpa [#allocation4], 1
    %s576 = scalar_lea.sflag [#allocation4], 1
    %577 = vsyncpa %s576, 1
    %578 = vsyncpa [#allocation7], 1
    %579 = vsyncpa [#allocation5], 1
    %s580 = scalar_lea.sflag [#allocation5], 1
    %581 = vsyncpa %s580, 1

</llo_original>
